<compile_context>
chip_gen: v5e
topology: v5e:2x2
jax: 0.10.0
libtpu: 0.0.40
codegen_flags: <defaults>
</compile_context>

<pallas_src>
import jax
import jax.numpy as jnp
from jax.experimental import pallas as pl
from jax.experimental.pallas import tpu as pltpu


def _make_dynamics_kernel(inv_hw):
    """inv_hw: static 1/(H*W) for the global-average-pool."""

    def kernel(xk_ref, wk_ref, bc_ref, wrt_ref, brt_ref, mask_ref,
               out_ref, rew_ref):
        # xk_ref  : (9*C_in, NTOT) bf16  tap-stacked, padded, flattened-spatial slab (1 batch)
        # wk_ref  : (C_out, 9*C_in) bf16 conv weights in transposed-GEMM layout
        # bc_ref  : (C_out, 1)  f32
        # wrt_ref : (R, C_out)  f32  reward head weight (transposed)
        # brt_ref : (R, 1)      f32
        # mask_ref: (1, NTOT)   f32  validity mask (1 on real HxW output columns)
        # out_ref : (C_out, NTOT) bf16  conv+ReLU slab (lane-dense store)
        # rew_ref : (R, 1)      f32   reward logits for this batch

        # 3x3 conv as ONE stacked-K GEMM (K = 9*C_in), f32 accumulation on the MXU.
        acc = jnp.dot(wk_ref[...], xk_ref[...],
                      preferred_element_type=jnp.float32)        # (C_out, NTOT)

        # Fused bias + ReLU epilogue in f32 (VPU), lane-dense store.
        h = jnp.maximum(acc + bc_ref[...], 0.0)
        out_ref[...] = h.astype(out_ref.dtype)

        # Reward head: masked global-average-pool as a lane reduction, then linear.
        pooled = jnp.sum(h * mask_ref[...], axis=1, keepdims=True) * inv_hw  # (C_out, 1)
        rew_ref[...] = (jnp.dot(wrt_ref[...], pooled,
                                preferred_element_type=jnp.float32)
                        + brt_ref[...])                                       # (R, 1)

    return kernel


def prepare_dynamics_params(params, H, W):
    """Hoist input-independent re-layouts out of the per-call path (run once)."""
    w_conv = params["w_conv"]          # (C_out, C_in, 3, 3)  PyTorch OIHW layout
    b_conv = params["b_conv"]          # (C_out,)
    w_rew = params["w_rew"]            # (C_out, R)
    b_rew = params["b_rew"]            # (R,)
    C_out, C_in = w_conv.shape[0], w_conv.shape[1]
    R = w_rew.shape[1]

    Wp = W + 2
    P = (H + 2) * Wp                   # padded positions per image
    NTOT = ((P + 127) // 128) * 128    # lane-dense per-batch slab width

    # OIHW -> (C_out, 9*C_in) with K ordered (di, dj, ci), matching the tap stacking.
    wk = jnp.transpose(w_conv, (0, 2, 3, 1)).reshape(C_out, 9 * C_in).astype(jnp.bfloat16)
    bc = b_conv.reshape(C_out, 1).astype(jnp.float32)
    wrt = jnp.transpose(w_rew).astype(jnp.float32)                 # (R, C_out)
    brt = b_rew.reshape(R, 1).astype(jnp.float32)

    # Output column q = i*Wp + j is a real conv output iff i < H and j < W
    # (columns >= P automatically fail i < H, so no extra q < P term is needed).
    col = jnp.arange(NTOT)
    valid = ((col // Wp) < H) & ((col % Wp) < W)
    mask = valid.astype(jnp.float32)[None, :]                      # (1, NTOT)

    return {"wk": wk, "bc": bc, "wrt": wrt, "brt": brt, "mask": mask}


@jax.jit
def dynamics_network_forward(state_action_encoding, prepped):
    """state_action_encoding: (B, C_in, H, W) float32 (PyTorch NCHW convention).

    Returns (next_latent_state (B, C_out, H, W) f32, reward_logits (B, R) f32).
    """
    B, C_in, H, W = state_action_encoding.shape
    C_out = prepped["wk"].shape[0]
    R = prepped["wrt"].shape[0]
    Wp = W + 2
    P = (H + 2) * Wp
    NTOT = prepped["mask"].shape[1]
    KD = 9 * C_in
    inv_hw = 1.0 / float(H * W)
    assert prepped["wk"].shape[1] == KD

    # --- layout plumbing (all fused under jit): per-batch, channel-major, zero-padded,
    # flattened-spatial slabs, with the 9 conv taps stacked along the contraction axis.
    # Tap (di, dj) at output column q = i*Wp + j reads padded position q + di*Wp + dj,
    # which for every valid output column stays inside this batch's own P columns
    # (max index = (H+1)*Wp + (W+1) = P - 1), so no cross-batch leakage is possible.
    xp = jnp.pad(state_action_encoding, ((0, 0), (0, 0), (1, 1), (1, 1)))
    xf = xp.reshape(B, C_in, P)
    taps = []
    for di in range(3):
        for dj in range(3):
            off = di * Wp + dj
            t = xf[:, :, off:]                                     # (B, C_in, P - off)
            taps.append(jnp.pad(t, ((0, 0), (0, 0), (0, NTOT - (P - off)))))
    x_stack = jnp.concatenate(taps, axis=1).astype(jnp.bfloat16)   # (B, 9*C_in, NTOT)

    kernel = _make_dynamics_kernel(inv_hw)

    # Per-block VMEM (double-buffered): x (KD,NTOT) bf16 + out (C_out,NTOT) bf16
    # + tiny constants -> tens of KB; far inside every chip's VMEM budget.
    out_slab, rew_slab = pl.pallas_call(
        kernel,
        out_shape=(
            jax.ShapeDtypeStruct((B, C_out, NTOT), jnp.bfloat16),
            jax.ShapeDtypeStruct((B, R, 1), jnp.float32),
        ),
        grid_spec=pltpu.PrefetchScalarGridSpec(
            num_scalar_prefetch=0,
            grid=(B,),
            in_specs=[
                pl.BlockSpec((pl.Squeezed(), KD, NTOT), lambda b: (b, 0, 0)),
                pl.BlockSpec((C_out, KD), lambda b: (0, 0)),
                pl.BlockSpec((C_out, 1), lambda b: (0, 0)),
                pl.BlockSpec((R, C_out), lambda b: (0, 0)),
                pl.BlockSpec((R, 1), lambda b: (0, 0)),
                pl.BlockSpec((1, NTOT), lambda b: (0, 0)),
            ],
            out_specs=[
                pl.BlockSpec((pl.Squeezed(), C_out, NTOT), lambda b: (b, 0, 0)),
                pl.BlockSpec((pl.Squeezed(), R, 1), lambda b: (b, 0, 0)),
            ],
        ),
        compiler_params=pltpu.CompilerParams(
            dimension_semantics=("parallel",),
            vmem_limit_bytes=32 * 1024 * 1024),
    )(x_stack, prepped["wk"], prepped["bc"], prepped["wrt"], prepped["brt"],
      prepped["mask"])

    # Strip halo/padding columns; (C_out, spatial) is already NCHW-ordered per batch.
    h = out_slab[:, :, :P].astype(jnp.float32).reshape(B, C_out, H + 2, W + 2)
    next_latent_state = h[:, :, :H, :W]
    reward_logits = rew_slab[:, :, 0]                              # (B, R)
    return next_latent_state, reward_logits


def init_params(key, c_in, c_out, reward_support):
    """Deterministic synthetic parameters (shapes follow nn.Conv2d / nn.Linear)."""
    k1, k2, k3, k4 = jax.random.split(key, 4)
    w_conv = jax.random.normal(k1, (c_out, c_in, 3, 3), jnp.float32) * 0.1
    b_conv = jax.random.normal(k2, (c_out,), jnp.float32) * 0.1
    w_rew = jax.random.normal(k3, (c_out, reward_support), jnp.float32) * 0.1
    b_rew = jax.random.normal(k4, (reward_support,), jnp.float32) * 0.1
    return {"w_conv": w_conv, "b_conv": b_conv, "w_rew": w_rew, "b_rew": b_rew}


def _reference(state_action_encoding, params):
    """Pure-JAX f32 reference (lax.conv) for a correctness check."""
    h = jax.lax.conv_general_dilated(
        state_action_encoding, params["w_conv"], window_strides=(1, 1),
        padding="SAME", dimension_numbers=("NCHW", "OIHW", "NCHW"))
    h = jnp.maximum(h + params["b_conv"][None, :, None, None], 0.0)
    pooled = jnp.mean(h, axis=(2, 3))
    return h, pooled @ params["w_rew"] + params["b_rew"]


if __name__ == "__main__":
    B, C_in, H, W = 2, 8, 8, 8          # state(4) + action(4) channels, 8x8 latent
    C_out, REWARD_SUPPORT = 16, 21

    key = jax.random.PRNGKey(0)
    kx, kp = jax.random.split(key)
    state_action_encoding = jax.random.normal(kx, (B, C_in, H, W), jnp.float32)
    params = init_params(kp, C_in, C_out, REWARD_SUPPORT)

    prepped = prepare_dynamics_params(params, H, W)   # once per model, not per call
    next_state, reward = dynamics_network_forward(state_action_encoding, prepped)
    next_state = jax.block_until_ready(next_state)
    reward = jax.block_until_ready(reward)

    ref_state, ref_reward = _reference(state_action_encoding, params)
    assert next_state.shape == (B, C_out, H, W)
    assert reward.shape == (B, REWARD_SUPPORT)
    # bf16 activations/weights in the kernel -> compare with bf16-level tolerance.
    assert jnp.allclose(next_state, ref_state, atol=5e-2, rtol=5e-2)
    assert jnp.allclose(reward, ref_reward, atol=5e-2, rtol=5e-2)

    print("KERNEL_OK")
</pallas_src>

<mosaic_0001>
module attributes {stable_mosaic.version = 11 : i64} {
  func.func @kernel(%arg0: i32, %arg1: memref<1x72x128xbf16, #tpu.memory_space<vmem>>, %arg2: memref<16x72xbf16, #tpu.memory_space<vmem>>, %arg3: memref<16x1xf32, #tpu.memory_space<vmem>>, %arg4: memref<21x16xf32, #tpu.memory_space<vmem>>, %arg5: memref<21x1xf32, #tpu.memory_space<vmem>>, %arg6: memref<1x128xf32, #tpu.memory_space<vmem>>, %arg7: memref<1x16x128xbf16, #tpu.memory_space<vmem>>, %arg8: memref<1x21x1xf32, #tpu.memory_space<vmem>>) attributes {dimension_semantics = [#tpu.dimension_semantics<parallel>], iteration_bounds = array<i64: 2>, scalar_prefetch = 0 : i64, scratch_operands = 0 : i64, tpu.core_type = #tpu.core_type<tc>, window_params = [{transform_indices = @transform_0, window_bounds = array<i64: 1, 72, 128>}, {pipeline_mode = #tpu.pipeline_mode<synchronous>, transform_indices = @transform_1, window_bounds = array<i64: 16, 72>}, {pipeline_mode = #tpu.pipeline_mode<synchronous>, transform_indices = @transform_2, window_bounds = array<i64: 16, 1>}, {pipeline_mode = #tpu.pipeline_mode<synchronous>, transform_indices = @transform_3, window_bounds = array<i64: 21, 16>}, {pipeline_mode = #tpu.pipeline_mode<synchronous>, transform_indices = @transform_4, window_bounds = array<i64: 21, 1>}, {pipeline_mode = #tpu.pipeline_mode<synchronous>, transform_indices = @transform_5, window_bounds = array<i64: 1, 128>}, {transform_indices = @transform_6, window_bounds = array<i64: 1, 16, 128>}, {transform_indices = @transform_7, window_bounds = array<i64: 1, 21, 1>}]} {
    %c0 = arith.constant 0 : index
    %c0_0 = arith.constant 0 : index
    %0 = vector.load %arg2[%c0, %c0_0] : memref<16x72xbf16, #tpu.memory_space<vmem>>, vector<16x72xbf16>
    %c0_1 = arith.constant 0 : index
    %c0_2 = arith.constant 0 : index
    %c0_3 = arith.constant 0 : index
    %1 = vector.load %arg1[%c0_1, %c0_2, %c0_3] : memref<1x72x128xbf16, #tpu.memory_space<vmem>>, vector<1x72x128xbf16>
    %2 = vector.shape_cast %1 : vector<1x72x128xbf16> to vector<72x128xbf16>
    %cst = arith.constant dense<0.000000e+00> : vector<16x128xf32>
    %3 = tpu.matmul %0, %2, %cst {dimension_numbers = #tpu.dot_dimension_numbers<[1], [0], [0], [1], [0, 0, 1, 1], [], []>} : vector<16x72xbf16>, vector<72x128xbf16>, vector<16x128xf32> -> vector<16x128xf32>
    %c0_4 = arith.constant 0 : index
    %c0_5 = arith.constant 0 : index
    %4 = vector.load %arg3[%c0_4, %c0_5] : memref<16x1xf32, #tpu.memory_space<vmem>>, vector<16x1xf32>
    %5 = vector.broadcast %4 : vector<16x1xf32> to vector<16x128xf32>
    %6 = arith.addf %3, %5 : vector<16x128xf32>
    %cst_6 = arith.constant 0.000000e+00 : f32
    %7 = vector.broadcast %cst_6 : f32 to vector<16x128xf32>
    %8 = arith.maximumf %6, %7 : vector<16x128xf32>
    %9 = arith.truncf %8 : vector<16x128xf32> to vector<16x128xbf16>
    %c0_7 = arith.constant 0 : index
    %c0_8 = arith.constant 0 : index
    %c0_9 = arith.constant 0 : index
    %10 = vector.load %arg7[%c0_7, %c0_8, %c0_9] : memref<1x16x128xbf16, #tpu.memory_space<vmem>>, vector<1x16x128xbf16>
    %11 = vector.shape_cast %10 : vector<1x16x128xbf16> to vector<16x128xbf16>
    %12 = vector.shape_cast %9 : vector<16x128xbf16> to vector<1x16x128xbf16>
    tpu.vector_store %arg7[%c0_7, %c0_8, %c0_9], %12 {strides = array<i32>} : memref<1x16x128xbf16, #tpu.memory_space<vmem>>, vector<1x16x128xbf16>,
    %c0_10 = arith.constant 0 : index
    %c0_11 = arith.constant 0 : index
    %13 = vector.load %arg6[%c0_10, %c0_11] : memref<1x128xf32, #tpu.memory_space<vmem>>, vector<1x128xf32>
    %14 = vector.broadcast %13 : vector<1x128xf32> to vector<16x128xf32>
    %15 = arith.mulf %8, %14 : vector<16x128xf32>
    %cst_12 = arith.constant dense<0.000000e+00> : vector<16xf32>
    %16 = vector.multi_reduction <add>, %15, %cst_12 [1] : vector<16x128xf32> to vector<16xf32>
    %17 = vector.shape_cast %16 : vector<16xf32> to vector<16x1xf32>
    %cst_13 = arith.constant 1.562500e-02 : f32
    %18 = vector.broadcast %cst_13 : f32 to vector<16x1xf32>
    %19 = arith.mulf %17, %18 : vector<16x1xf32>
    %c0_14 = arith.constant 0 : index
    %c0_15 = arith.constant 0 : index
    %20 = vector.load %arg4[%c0_14, %c0_15] : memref<21x16xf32, #tpu.memory_space<vmem>>, vector<21x16xf32>
    %cst_16 = arith.constant dense<0.000000e+00> : vector<21x1xf32>
    %21 = tpu.matmul %20, %19, %cst_16 {dimension_numbers = #tpu.dot_dimension_numbers<[1], [0], [0], [1], [0, 0, 1, 1], [], []>} : vector<21x16xf32>, vector<16x1xf32>, vector<21x1xf32> -> vector<21x1xf32>
    %c0_17 = arith.constant 0 : index
    %c0_18 = arith.constant 0 : index
    %22 = vector.load %arg5[%c0_17, %c0_18] : memref<21x1xf32, #tpu.memory_space<vmem>>, vector<21x1xf32>
    %23 = arith.addf %21, %22 : vector<21x1xf32>
    %c0_19 = arith.constant 0 : index
    %c0_20 = arith.constant 0 : index
    %c0_21 = arith.constant 0 : index
    %24 = vector.load %arg8[%c0_19, %c0_20, %c0_21] : memref<1x21x1xf32, #tpu.memory_space<vmem>>, vector<1x21x1xf32>
    %25 = vector.shape_cast %24 : vector<1x21x1xf32> to vector<21x1xf32>
    %26 = vector.shape_cast %23 : vector<21x1xf32> to vector<1x21x1xf32>
    tpu.vector_store %arg8[%c0_19, %c0_20, %c0_21], %26 {strides = array<i32>} : memref<1x21x1xf32, #tpu.memory_space<vmem>>, vector<1x21x1xf32>,
    return
  }
  func.func @transform_0(%arg0: i32) -> (i32, i32, i32) {
    %c0_i32 = arith.constant 0 : i32
    %c0_i32_0 = arith.constant 0 : i32
    %c0_i32_1 = arith.constant 0 : i32
    return %arg0, %c0_i32, %c0_i32_0 : i32, i32, i32
  }
  func.func @transform_1(%arg0: i32) -> (i32, i32) {
    %c0_i32 = arith.constant 0 : i32
    %c0_i32_0 = arith.constant 0 : i32
    %c0_i32_1 = arith.constant 0 : i32
    return %c0_i32, %c0_i32_0 : i32, i32
  }
  func.func @transform_2(%arg0: i32) -> (i32, i32) {
    %c0_i32 = arith.constant 0 : i32
    %c0_i32_0 = arith.constant 0 : i32
    %c0_i32_1 = arith.constant 0 : i32
    return %c0_i32, %c0_i32_0 : i32, i32
  }
  func.func @transform_3(%arg0: i32) -> (i32, i32) {
    %c0_i32 = arith.constant 0 : i32
    %c0_i32_0 = arith.constant 0 : i32
    %c0_i32_1 = arith.constant 0 : i32
    return %c0_i32, %c0_i32_0 : i32, i32
  }
  func.func @transform_4(%arg0: i32) -> (i32, i32) {
    %c0_i32 = arith.constant 0 : i32
    %c0_i32_0 = arith.constant 0 : i32
    %c0_i32_1 = arith.constant 0 : i32
    return %c0_i32, %c0_i32_0 : i32, i32
  }
  func.func @transform_5(%arg0: i32) -> (i32, i32) {
    %c0_i32 = arith.constant 0 : i32
    %c0_i32_0 = arith.constant 0 : i32
    %c0_i32_1 = arith.constant 0 : i32
    return %c0_i32, %c0_i32_0 : i32, i32
  }
  func.func @transform_6(%arg0: i32) -> (i32, i32, i32) {
    %c0_i32 = arith.constant 0 : i32
    %c0_i32_0 = arith.constant 0 : i32
    %c0_i32_1 = arith.constant 0 : i32
    return %arg0, %c0_i32, %c0_i32_0 : i32, i32, i32
  }
  func.func @transform_7(%arg0: i32) -> (i32, i32, i32) {
    %c0_i32 = arith.constant 0 : i32
    %c0_i32_0 = arith.constant 0 : i32
    %c0_i32_1 = arith.constant 0 : i32
    return %arg0, %c0_i32, %c0_i32_0 : i32, i32, i32
  }
}

</mosaic_0001>

<llo_original>
// kernel: dynamics_network_forward.1
$region0: #{dynamics_network_forward.1}
  #allocation0 [shape = 'u32[]', space=smem, size = 0x4, offset = 0x4, fixed_abs, tag = 'smem constant byte address 0x4 - core index']
  #allocation1 [shape = 'u32[72,128]{1,0:T(1,128)}', space=vmem, size = 0x9000, scoped, tag = 'internal scratch']
  %s0 = inlined_call_operand.vmem [shape: bf16[2,72,128], index: 0, kind: input, shape index: {}]
  %s1 = inlined_call_operand.vmem [shape: bf16[16,72], index: 1, kind: input, shape index: {}]
  %s2 = inlined_call_operand.vmem [shape: f32[16,1], index: 2, kind: input, shape index: {}]
  %s3 = inlined_call_operand.vmem [shape: f32[21,16], index: 3, kind: input, shape index: {}]
  %s4 = inlined_call_operand.vmem [shape: f32[21,1], index: 4, kind: input, shape index: {}]
  %s5 = inlined_call_operand.vmem [shape: f32[1,128], index: 5, kind: input, shape index: {}]
  %s6 = inlined_call_operand.vmem [shape: bf16[2,16,128], index: 6, kind: output, shape index: {0}]
  %s7 = inlined_call_operand.vmem [shape: f32[2,21,1], index: 7, kind: output, shape index: {1}]
  %8 = xla_tuple %s6, %s7
  %s9 = sld [smem:[#allocation0]]
  $region65: #{dynamics_network_forward.1} parent=0
    _
  %s11 = ssub.s32 1, %s9
  %s12 = scalar_select 0, %s11, %s9
  loop: start=0, step=1, limit=4
  $region2: #{dynamics_network_forward.1} parent=0 // loop_pre_header
    _
  $region3: #{dynamics_network_forward.1} parent=0 // loop_header
    %s14 = sphi 0, %s18
    %p15 = scmp.ge.s32.totalorder %s14, 4
    %s24 = sphi 0, %s26
    %s27 = sphi 0, %s24
    %s28 = sphi 0, %s27
    %s44 = sphi 0, %s28
    %s48 = sphi 0, %s48
    %s50 = sphi 0, %s48
    %s51 = sphi 0, %s50
    %s65 = sphi 0, %s51
    %s69 = sphi 0, %s69
    %s71 = sphi 0, %s69
    %s72 = sphi 0, %s71
    %s86 = sphi 0, %s72
    %s90 = sphi 0, %s90
    %s92 = sphi 0, %s90
    %s93 = sphi 0, %s92
    %s107 = sphi 0, %s93
    %s111 = sphi 0, %s111
    %s113 = sphi 0, %s111
    %s114 = sphi 0, %s113
    %s128 = sphi 0, %s114
    %s132 = sphi 0, %s132
    %s134 = sphi 0, %s132
    %s135 = sphi 0, %s134
    %s149 = sphi 0, %s135
    %s155 = sphi 0, %s157
    %s158 = sphi 0, %s155
    %s159 = sphi 0, %s158
    %s175 = sphi 0, %s159
    %s181 = sphi 0, %s183
    %s184 = sphi 0, %s181
    %s185 = sphi 0, %s184
    %s201 = sphi 0, %s185
  $region4: #{dynamics_network_forward.1} parent=0 // loop_header_branch
    %17 = sbr.rel (%p15) target = $region8
  $region5: #{dynamics_network_forward.1} parent=0 // loop_body
    %s19 = ssub.s32 %s14, 1
    %s20 = ssub.s32 %s14, 2
    %s21 = sadd.s32 %s14, 1
    %s22 = ssub.s32 %s14, %s21
    %p23 = scmp.eq.s32.totalorder %s22, 0
    %s25 = sadd.s32 %s24, 1
    %s26 = scalar_select %p23, %s24, %s25
    %p29 = pneg %p23
    %p30 = scmp.eq.s32.totalorder %s14, 1
    %p31 = por %p29, %p30
    %p32 = scmp.ne.s32.totalorder %s24, %s27
    %p33 = scmp.eq.s32.totalorder %s14, 0
    %p34 = por %p32, %p33
    %p35 = scmp.ne.s32.totalorder %s24, %s27
    %p36 = scmp.eq.s32.totalorder %s19, 1
    %p37 = por %p35, %p36
    %p38 = scmp.ne.s32.totalorder %s27, %s28
    %p39 = scmp.eq.s32.totalorder %s19, 0
    %p40 = por %p38, %p39
    %p41 = scmp.ne.s32.totalorder %s27, %s28
    %p42 = scmp.eq.s32.totalorder %s20, 1
    %p43 = por %p41, %p42
    %p45 = scmp.ne.s32.totalorder %s28, %s44
    %p46 = scmp.eq.s32.totalorder %s20, 0
    %p47 = por %p45, %p46
    %s49 = sadd.s32 %s48, 1
    %p52 = scmp.eq.s32.totalorder %s14, 1
    %p53 = scmp.ne.s32.totalorder %s48, %s50
    %p54 = scmp.eq.s32.totalorder %s14, 0
    %p55 = por %p53, %p54
    %p56 = scmp.ne.s32.totalorder %s48, %s50
    %p57 = scmp.eq.s32.totalorder %s19, 1
    %p58 = por %p56, %p57
    %p59 = scmp.ne.s32.totalorder %s50, %s51
    %p60 = scmp.eq.s32.totalorder %s19, 0
    %p61 = por %p59, %p60
    %p62 = scmp.ne.s32.totalorder %s50, %s51
    %p63 = scmp.eq.s32.totalorder %s20, 1
    %p64 = por %p62, %p63
    %p66 = scmp.ne.s32.totalorder %s51, %s65
    %p67 = scmp.eq.s32.totalorder %s20, 0
    %p68 = por %p66, %p67
    %s70 = sadd.s32 %s69, 1
    %p73 = scmp.eq.s32.totalorder %s14, 1
    %p74 = scmp.ne.s32.totalorder %s69, %s71
    %p75 = scmp.eq.s32.totalorder %s14, 0
    %p76 = por %p74, %p75
    %p77 = scmp.ne.s32.totalorder %s69, %s71
    %p78 = scmp.eq.s32.totalorder %s19, 1
    %p79 = por %p77, %p78
    %p80 = scmp.ne.s32.totalorder %s71, %s72
    %p81 = scmp.eq.s32.totalorder %s19, 0
    %p82 = por %p80, %p81
    %p83 = scmp.ne.s32.totalorder %s71, %s72
    %p84 = scmp.eq.s32.totalorder %s20, 1
    %p85 = por %p83, %p84
    %p87 = scmp.ne.s32.totalorder %s72, %s86
    %p88 = scmp.eq.s32.totalorder %s20, 0
    %p89 = por %p87, %p88
    %s91 = sadd.s32 %s90, 1
    %p94 = scmp.eq.s32.totalorder %s14, 1
    %p95 = scmp.ne.s32.totalorder %s90, %s92
    %p96 = scmp.eq.s32.totalorder %s14, 0
    %p97 = por %p95, %p96
    %p98 = scmp.ne.s32.totalorder %s90, %s92
    %p99 = scmp.eq.s32.totalorder %s19, 1
    %p100 = por %p98, %p99
    %p101 = scmp.ne.s32.totalorder %s92, %s93
    %p102 = scmp.eq.s32.totalorder %s19, 0
    %p103 = por %p101, %p102
    %p104 = scmp.ne.s32.totalorder %s92, %s93
    %p105 = scmp.eq.s32.totalorder %s20, 1
    %p106 = por %p104, %p105
    %p108 = scmp.ne.s32.totalorder %s93, %s107
    %p109 = scmp.eq.s32.totalorder %s20, 0
    %p110 = por %p108, %p109
    %s112 = sadd.s32 %s111, 1
    %p115 = scmp.eq.s32.totalorder %s14, 1
    %p116 = scmp.ne.s32.totalorder %s111, %s113
    %p117 = scmp.eq.s32.totalorder %s14, 0
    %p118 = por %p116, %p117
    %p119 = scmp.ne.s32.totalorder %s111, %s113
    %p120 = scmp.eq.s32.totalorder %s19, 1
    %p121 = por %p119, %p120
    %p122 = scmp.ne.s32.totalorder %s113, %s114
    %p123 = scmp.eq.s32.totalorder %s19, 0
    %p124 = por %p122, %p123
    %p125 = scmp.ne.s32.totalorder %s113, %s114
    %p126 = scmp.eq.s32.totalorder %s20, 1
    %p127 = por %p125, %p126
    %p129 = scmp.ne.s32.totalorder %s114, %s128
    %p130 = scmp.eq.s32.totalorder %s20, 0
    %p131 = por %p129, %p130
    %s133 = sadd.s32 %s132, 1
    %p136 = scmp.eq.s32.totalorder %s14, 1
    %p137 = scmp.ne.s32.totalorder %s132, %s134
    %p138 = scmp.eq.s32.totalorder %s14, 0
    %p139 = por %p137, %p138
    %p140 = scmp.ne.s32.totalorder %s132, %s134
    %p141 = scmp.eq.s32.totalorder %s19, 1
    %p142 = por %p140, %p141
    %p143 = scmp.ne.s32.totalorder %s134, %s135
    %p144 = scmp.eq.s32.totalorder %s19, 0
    %p145 = por %p143, %p144
    %p146 = scmp.ne.s32.totalorder %s134, %s135
    %p147 = scmp.eq.s32.totalorder %s20, 1
    %p148 = por %p146, %p147
    %p150 = scmp.ne.s32.totalorder %s135, %s149
    %p151 = scmp.eq.s32.totalorder %s20, 0
    %p152 = por %p150, %p151
    %s153 = ssub.s32 %s14, %s21
    %p154 = scmp.eq.s32.totalorder %s153, 0
    %s156 = sadd.s32 %s155, 1
    %s157 = scalar_select %p154, %s155, %s156
    %p160 = pneg %p154
    %p161 = scmp.eq.s32.totalorder %s14, 1
    %p162 = por %p160, %p161
    %p163 = scmp.ne.s32.totalorder %s155, %s158
    %p164 = scmp.eq.s32.totalorder %s14, 0
    %p165 = por %p163, %p164
    %p166 = scmp.ne.s32.totalorder %s155, %s158
    %p167 = scmp.eq.s32.totalorder %s19, 1
    %p168 = por %p166, %p167
    %p169 = scmp.ne.s32.totalorder %s158, %s159
    %p170 = scmp.eq.s32.totalorder %s19, 0
    %p171 = por %p169, %p170
    %p172 = scmp.ne.s32.totalorder %s158, %s159
    %p173 = scmp.eq.s32.totalorder %s20, 1
    %p174 = por %p172, %p173
    %p176 = scmp.ne.s32.totalorder %s159, %s175
    %p177 = scmp.eq.s32.totalorder %s20, 0
    %p178 = por %p176, %p177
    %s179 = ssub.s32 %s14, %s21
    %p180 = scmp.eq.s32.totalorder %s179, 0
    %s182 = sadd.s32 %s181, 1
    %s183 = scalar_select %p180, %s181, %s182
    %p186 = pneg %p180
    %p187 = scmp.eq.s32.totalorder %s14, 1
    %p188 = por %p186, %p187
    %p189 = scmp.ne.s32.totalorder %s181, %s184
    %p190 = scmp.eq.s32.totalorder %s14, 0
    %p191 = por %p189, %p190
    %p192 = scmp.ne.s32.totalorder %s181, %s184
    %p193 = scmp.eq.s32.totalorder %s19, 1
    %p194 = por %p192, %p193
    %p195 = scmp.ne.s32.totalorder %s184, %s185
    %p196 = scmp.eq.s32.totalorder %s19, 0
    %p197 = por %p195, %p196
    %p198 = scmp.ne.s32.totalorder %s184, %s185
    %p199 = scmp.eq.s32.totalorder %s20, 1
    %p200 = por %p198, %p199
    %p202 = scmp.ne.s32.totalorder %s185, %s201
    %p203 = scmp.eq.s32.totalorder %s20, 0
    %p204 = por %p202, %p203
    %p205 = scmp.le.s32.totalorder 1, %s14
    %p206 = scmp.lt.s32.totalorder %s14, 3
    %p207 = pnand %p205, %p206
    %p208 = pneg %p207
    // Predicated region
    $region9: #{dynamics_network_forward.1} parent=5 // pred_check
      _
    $region10: #{dynamics_network_forward.1} parent=5 // pred_check_branch
      %210 = sbr.rel (%p207) target = $region12
    $region11: #{dynamics_network_forward.1} parent=5 // pred_region
      %s211 = ssub.s32 %s14, 1
      // Predicated region
      $region13: #{dynamics_network_forward.1} parent=11 // pred_check
        %p212 = pneg %p61
      $region14: #{dynamics_network_forward.1} parent=11 // pred_check_branch
        %214 = sbr.rel (%p212) target = $region16
      $region15: #{dynamics_network_forward.1} parent=11 // pred_region
        _
      $region16: #{dynamics_network_forward.1} parent=11 // pred_fallthru
        _
      // Predicated region
      $region17: #{dynamics_network_forward.1} parent=11 // pred_check
        %p215 = pneg %p82
      $region18: #{dynamics_network_forward.1} parent=11 // pred_check_branch
        %217 = sbr.rel (%p215) target = $region20
      $region19: #{dynamics_network_forward.1} parent=11 // pred_region
        _
      $region20: #{dynamics_network_forward.1} parent=11 // pred_fallthru
        _
      // Predicated region
      $region21: #{dynamics_network_forward.1} parent=11 // pred_check
        %p218 = pneg %p103
      $region22: #{dynamics_network_forward.1} parent=11 // pred_check_branch
        %220 = sbr.rel (%p218) target = $region24
      $region23: #{dynamics_network_forward.1} parent=11 // pred_region
        _
      $region24: #{dynamics_network_forward.1} parent=11 // pred_fallthru
        _
      // Predicated region
      $region25: #{dynamics_network_forward.1} parent=11 // pred_check
        %p221 = pneg %p124
      $region26: #{dynamics_network_forward.1} parent=11 // pred_check_branch
        %223 = sbr.rel (%p221) target = $region28
      $region27: #{dynamics_network_forward.1} parent=11 // pred_region
        _
      $region28: #{dynamics_network_forward.1} parent=11 // pred_fallthru
        _
      // Predicated region
      $region29: #{dynamics_network_forward.1} parent=11 // pred_check
        %p224 = pneg %p145
      $region30: #{dynamics_network_forward.1} parent=11 // pred_check_branch
        %226 = sbr.rel (%p224) target = $region32
      $region31: #{dynamics_network_forward.1} parent=11 // pred_region
        _
      $region32: #{dynamics_network_forward.1} parent=11 // pred_fallthru
        _
    $region12: #{dynamics_network_forward.1} parent=5 // pred_fallthru
      _
    %p227 = scmp.lt.s32.totalorder %s14, 2
    // Predicated region
    $region33: #{dynamics_network_forward.1} parent=5 // pred_check
      %p228 = pneg %p227
    $region34: #{dynamics_network_forward.1} parent=5 // pred_check_branch
      %230 = sbr.rel (%p228) target = $region36
    $region35: #{dynamics_network_forward.1} parent=5 // pred_region
      // Predicated region
      $region37: #{dynamics_network_forward.1} parent=35 // pred_check
        %p231 = pneg %p34
      $region38: #{dynamics_network_forward.1} parent=35 // pred_check_branch
        %233 = sbr.rel (%p231) target = $region40
      $region39: #{dynamics_network_forward.1} parent=35 // pred_region
        %p234 = scmp.lt.s32.totalorder %s14, 1
        %s235 = scalar_select %p234, %s14, 1
        %s236 = smul.addr %s235, 9
        %s237 = smul.addr %s236, 4
        %s238 = scalar_lea.vmem %s0, %s237
      $region40: #{dynamics_network_forward.1} parent=35 // pred_fallthru
        _
    $region36: #{dynamics_network_forward.1} parent=5 // pred_fallthru
      _
    %p239 = scmp.le.s32.totalorder 1, %s14
    %p240 = scmp.lt.s32.totalorder %s14, 3
    %p241 = pnand %p239, %p240
    %p242 = pneg %p241
    // Predicated region
    $region41: #{dynamics_network_forward.1} parent=5 // pred_check
      _
    $region42: #{dynamics_network_forward.1} parent=5 // pred_check_branch
      %244 = sbr.rel (%p241) target = $region44
    $region43: #{dynamics_network_forward.1} parent=5 // pred_region
      %s245 = ssub.s32 %s14, 1
      %p246 = scmp.lt.s32.totalorder %s19, 1
      %s247 = scalar_select %p246, %s19, 1
      %s248 = smul.addr %s247, 9
      %s249 = smul.addr %s248, 4
      %s250 = scalar_lea.vmem %s0, %s249
      %p251 = pneg %p40
      %p252 = pneg %p37
      %p253 = pneg %p61
      %p254 = pneg %p58
      %p255 = pneg %p82
      %p256 = pneg %p79
      %p257 = pneg %p103
      %p258 = pneg %p100
      %p259 = pneg %p124
      %p260 = pneg %p121
      %p261 = pneg %p145
      %p262 = pneg %p142
      %p263 = pneg %p171
      %p264 = pneg %p168
      %p265 = scmp.lt.s32.totalorder %s19, 1
      %s266 = scalar_select %p265, %s19, 1
      %s267 = smul.addr %s266, 2
      %s268 = smul.addr %s267, 4
      %s269 = scalar_lea.vmem %s6, %s268
      %p270 = pneg %p197
      %p271 = pneg %p194
      %p272 = scmp.lt.s32.totalorder %s19, 1
      %s273 = scalar_select %p272, %s19, 1
      %s274 = smul.addr %s273, 3
      %s275 = smul.addr %s274, 8
      %s276 = scalar_lea.vmem %s7, %s275
      %p277 = scmp.lt.s32.totalorder %s19, 1
      %s278 = scalar_select %p277, %s19, 1
      %s279 = smul.addr %s278, 9
      %s280 = smul.addr %s279, 4
      %s281 = scalar_lea.vmem %s0, %s280
      %p282 = scmp.lt.s32.totalorder %s19, 1
      %s283 = scalar_select %p282, %s19, 1
      %s284 = smul.addr %s283, 2
      %s285 = smul.addr %s284, 4
      %s286 = scalar_lea.vmem %s6, %s285
      %p287 = scmp.lt.s32.totalorder %s19, 1
      %s288 = scalar_select %p287, %s19, 1
      %s289 = smul.addr %s288, 3
      %s290 = smul.addr %s289, 8
      %s291 = scalar_lea.vmem %s7, %s290
      %v293 = vld [vmem:[%s1] sm:$0xf]
      %v294 = vld [vmem:[%s1 + $0x4] sm:$0xf]
      %v295 = vld [vmem:[%s281] sm:$0xf]
      %v296 = vld [vmem:[%s281 + $0x4] sm:$0xf]
      %v297 = vld [vmem:[%s281 + $0x8] sm:$0xf]
      %v298 = vld [vmem:[%s281 + $0xc] sm:$0xf]
      %v299 = vld [vmem:[%s281 + $0x10] sm:$0xf]
      %v300 = vld [vmem:[%s281 + $0x14] sm:$0xf]
      %v301 = vld [vmem:[%s281 + $0x18] sm:$0xf]
      %v302 = vld [vmem:[%s281 + $0x1c] sm:$0xf]
      %v303 = vld [vmem:[%s281 + $0x20] sm:$0xf]
      %v304 = vld [vmem:[%s2] sm:$0xff]
      %v305 = vld [vmem:[%s2 + $0x8] sm:$0xff]
      %307 = vset.pattern.permute.xlu0 0
      %308 = vperm.xlu0 %307, %v304
      %v309 = vpop.permute.xlu0 %308
      %312 = vset.pattern.permute.xlu0 0
      %313 = vperm.xlu0 %312, %v305
      %v314 = vpop.permute.xlu0 %313
      %v318 = vunpack.c.l.b16 %v293
      %v319 = vunpack.c.l.b16 %v294
      %v320 = vpack.c.b16 %v319, %v318
      %v330 = vunpack.c.l.b16 %v295
      %v331 = vunpack.c.l.b16 %v296
      %v332 = vunpack.c.l.b16 %v297
      %v333 = vunpack.c.l.b16 %v298
      %v334 = vunpack.c.l.b16 %v299
      %v335 = vunpack.c.l.b16 %v300
      %v336 = vunpack.c.l.b16 %v301
      %v337 = vunpack.c.l.b16 %v302
      %v338 = vunpack.c.l.b16 %v303
      %v339 = vpack.c.b16 %v331, %v330
      %v340 = vpack.c.b16 %v333, %v332
      %v341 = vpack.c.b16 %v335, %v334
      %v342 = vpack.c.b16 %v337, %v336
      %v343 = vpack.c.b16 %v338, %v338
      %vm348 = vcmask 588800
      %v350 = vsel %vm348, %v320, 0
      %vm352 = vcmask 1043456
      %v354 = vsel %vm352, %v343, 0
      %356 = vmatpush.bf16.msra.mxu0 0
      %357 = vmatpush.bf16.msra.mxu0 0
      %358 = vmatpush.bf16.msra.mxu0 0
      %359 = vmatpush.bf16.msra.mxu0 %v354
      %360 = vmatpush.bf16.msra.mxu0 %v342
      %361 = vmatpush.bf16.msra.mxu0 %v341
      %362 = vmatpush.bf16.msra.mxu0 %v340
      %363 = vmatpush.bf16.msra.mxu0 %v339
      %364 = vmatmul.bf16.gmra.mxu0 %v350
      %v365 = vpop.f32.mrf.mxu0
      %v366 = vadd.f32 %v309, %v365
      %v367 = vpop.f32.mrf.mxu0
      %v368 = vadd.f32 %v314, %v367
      %369 = vdwg.mxu0
      %v370 = vmax.f32 %v366, 0.0
      %v371 = vmax.f32 %v368, 0.0
      %v372 = vpack.c.bf16 %v370, %v370
      %v373 = vpack.c.bf16 %v371, %v371
      %374 = vst [vmem:[%s286] sm:$0xf] %v372
      %375 = vst [vmem:[%s286 + $0x4] sm:$0xf] %v373
      %v376 = vld [vmem:[%s5] sm:$0x1]
      %v378 = vperm.slane %v376, 0
      %v380 = vmul.f32 %v370, %v378
      %v381 = vmul.f32 %v371, %v378
      %382 = vadd.xlane.f32.xlu0 %v380
      %v383 = vpop.xlane.xlu0 %382
      %384 = vadd.xlane.f32.xlu0 %v381
      %v385 = vpop.xlane.xlu0 %384
      %v386 = vmul.f32 %v383, 0.015625
      %v387 = vmul.f32 %v385, 0.015625
      %v388 = vld [vmem:[%s3] sm:$0xff]
      %v389 = vld [vmem:[%s3 + $0x8] sm:$0xff]
      %v390 = vld [vmem:[%s3 + $0x10] sm:$0x1f]
      %v391 = vld [vmem:[%s4] sm:$0xff]
      %v392 = vld [vmem:[%s4 + $0x8] sm:$0xff]
      %v393 = vld [vmem:[%s4 + $0x10] sm:$0x1f]
      %vm394 = vcmask 130048
      %v396 = vsel %vm394, %v388, 0
      %v399 = vsel %vm394, %v389, 0
      %v402 = vsel %vm394, %v390, 0
      %404 = vmatpush.msra.mxu0 0.0
      %405 = vmatpush.msra.mxu0 0.0
      %406 = vmatpush.msra.mxu0 0.0
      %407 = vmatpush.msra.mxu0 0.0
      %408 = vmatpush.msra.mxu0 0.0
      %409 = vmatpush.msra.mxu0 0.0
      %410 = vmatpush.msra.mxu0 0.0
      %411 = vmatpush.msra.mxu0 0.0
      %412 = vmatpush.msra.mxu0 0.0
      %413 = vmatpush.msra.mxu0 0.0
      %414 = vmatpush.msra.mxu0 0.0
      %415 = vmatpush.msra.mxu0 0.0
      %416 = vmatpush.msra.mxu0 0.0
      %417 = vmatpush.msra.mxu0 0.0
      %418 = vmatpush.msra.mxu0 %v387
      %419 = vmatpush.msra.mxu0 %v386
      %420 = vmatmul.f32.gmra.mxu0 %v396
      %v421 = vpop.f32.mrf.mxu0
      %v422 = vadd.f32 %v391, %v421
      %423 = vmatmul.f32.gmra.mxu0 %v399
      %v424 = vpop.f32.mrf.mxu0
      %v425 = vadd.f32 %v392, %v424
      %426 = vmatmul.f32.gmra.mxu0 %v402
      %v427 = vpop.f32.mrf.mxu0
      %v428 = vadd.f32 %v393, %v427
      %429 = vdwg.mxu0
      %vm430 = vcmask 7168
      %431 = vst.msk [vmem:[%s291] sm:$0xff] %vm430, %v422
      %432 = vst.msk [vmem:[%s291 + $0x8] sm:$0xff] %vm430, %v425
      %vm433 = vcmask 4096
      %434 = vst.msk [vmem:[%s291 + $0x10] sm:$0x1f] %vm433, %v428
      %p435 = scmp.lt.s32.totalorder %s19, 1
      %s436 = scalar_select %p435, %s19, 1
      %s437 = smul.addr %s436, 2
      %s438 = smul.addr %s437, 4
      %s439 = scalar_lea.vmem %s6, %s438
      %p440 = scmp.lt.s32.totalorder %s19, 1
      %s441 = scalar_select %p440, %s19, 1
      %s442 = smul.addr %s441, 3
      %s443 = smul.addr %s442, 8
      %s444 = scalar_lea.vmem %s7, %s443
      // Predicated region
      $region45: #{dynamics_network_forward.1} parent=43 // pred_check
        %p445 = pneg %p168
      $region46: #{dynamics_network_forward.1} parent=43 // pred_check_branch
        %447 = sbr.rel (%p445) target = $region48
      $region47: #{dynamics_network_forward.1} parent=43 // pred_region
        _
      $region48: #{dynamics_network_forward.1} parent=43 // pred_fallthru
        _
      // Predicated region
      $region49: #{dynamics_network_forward.1} parent=43 // pred_check
        %p448 = pneg %p194
      $region50: #{dynamics_network_forward.1} parent=43 // pred_check_branch
        %450 = sbr.rel (%p448) target = $region52
      $region51: #{dynamics_network_forward.1} parent=43 // pred_region
        _
      $region52: #{dynamics_network_forward.1} parent=43 // pred_fallthru
        _
    $region44: #{dynamics_network_forward.1} parent=5 // pred_fallthru
      _
    %p451 = scmp.le.s32.totalorder 2, %s14
    // Predicated region
    $region53: #{dynamics_network_forward.1} parent=5 // pred_check
      %p452 = pneg %p451
    $region54: #{dynamics_network_forward.1} parent=5 // pred_check_branch
      %454 = sbr.rel (%p452) target = $region56
    $region55: #{dynamics_network_forward.1} parent=5 // pred_region
      %s455 = ssub.s32 %s14, 2
      // Predicated region
      $region57: #{dynamics_network_forward.1} parent=55 // pred_check
        %p456 = pneg %p174
      $region58: #{dynamics_network_forward.1} parent=55 // pred_check_branch
        %458 = sbr.rel (%p456) target = $region60
      $region59: #{dynamics_network_forward.1} parent=55 // pred_region
        %p459 = scmp.lt.s32.totalorder %s20, 1
        %s460 = scalar_select %p459, %s20, 1
        %s461 = smul.addr %s460, 2
        %s462 = smul.addr %s461, 4
        %s463 = scalar_lea.vmem %s6, %s462
      $region60: #{dynamics_network_forward.1} parent=55 // pred_fallthru
        _
      // Predicated region
      $region61: #{dynamics_network_forward.1} parent=55 // pred_check
        %p464 = pneg %p200
      $region62: #{dynamics_network_forward.1} parent=55 // pred_check_branch
        %466 = sbr.rel (%p464) target = $region64
      $region63: #{dynamics_network_forward.1} parent=55 // pred_region
        %p467 = scmp.lt.s32.totalorder %s20, 1
        %s468 = scalar_select %p467, %s20, 1
        %s469 = smul.addr %s468, 3
        %s470 = smul.addr %s469, 8
        %s471 = scalar_lea.vmem %s7, %s470
      $region64: #{dynamics_network_forward.1} parent=55 // pred_fallthru
        _
    $region56: #{dynamics_network_forward.1} parent=5 // pred_fallthru
      _
  $region6: #{dynamics_network_forward.1} parent=0 // loop_footer
    %s18 = sadd.s32 1, %s14
  $region7: #{dynamics_network_forward.1} parent=0 // loop_footer_branch
    %13 = sbr.rel target = $region3
  $region8: #{dynamics_network_forward.1} parent=0 // loop_exit
    _

</llo_original>
